<compile_context>
chip_gen: v7x
topology: tpu7x:2x2x1
jax: 0.10.0
libtpu: 0.0.40
codegen_flags: <defaults>
</compile_context>

<pallas_src>
import functools

import jax
import jax.numpy as jnp
from jax.experimental import pallas as pl
from jax.experimental.pallas import tpu as pltpu


# ----------------------------------------------------------------------------
# Tiling / VMEM helpers
# ----------------------------------------------------------------------------
def _choose_tile(dim, target, align):
    """Largest multiple of `align` <= target that divides `dim`; else full dim."""
    if dim <= target:
        return dim
    t = (target // align) * align
    while t >= align:
        if dim % t == 0:
            return t
        t -= align
    return dim


def _vmem_limit(*buffers):
    """buffers: (shape, itemsize, copies). Scoped-VMEM limit with headroom,
    floored at the 32 MiB default and capped below v7x's 64 MiB physical VMEM."""
    total = 0
    for shape, itemsize, copies in buffers:
        n = 1
        for s in shape:
            n *= s
        total += n * itemsize * copies
    return int(min(max(total * 3 // 2 + (2 << 20), 32 << 20), 56 << 20))


# ----------------------------------------------------------------------------
# Linear (tiled K-reduction matmul, bf16 in / f32 accumulate)
# ----------------------------------------------------------------------------
def _linear_kernel(x_ref, w_ref, b_ref, o_ref, acc_ref, *, activation):
    @pl.when(pl.program_id(2) == 0)
    def _():
        acc_ref[...] = jnp.zeros_like(acc_ref)

    acc_ref[...] += jnp.dot(x_ref[...], w_ref[...],
                            preferred_element_type=jnp.float32)

    @pl.when(pl.program_id(2) == pl.num_programs(2) - 1)
    def _():
        y = acc_ref[...] + b_ref[...]
        if activation == "gelu":
            # TODO(synk): HF BERT 'gelu' is the exact erf form; tanh approx used here.
            c = 0.7978845608028654  # sqrt(2/pi)
            y = 0.5 * y * (1.0 + jnp.tanh(c * (y + 0.044715 * y * y * y)))
        o_ref[...] = y.astype(o_ref.dtype)


def linear(x, w, b, activation=None, out_dtype=jnp.bfloat16):
    """x: (M, K), w: (K, N) [already transposed vs torch.nn.Linear], b: (1, N)."""
    M, K = x.shape
    N = w.shape[1]
    tm = _choose_tile(M, 512, 16)      # 16-aligned: bf16 packs 16 rows per vreg
    tn = _choose_tile(N, 512, 128)
    tk = _choose_tile(K, 512, 128)
    grid = (M // tm, N // tn, K // tk)
    vmem = _vmem_limit(((tm, tk), 2, 2), ((tk, tn), 2, 2), ((1, tn), 4, 2),
                       ((tm, tn), 2, 2), ((tm, tn), 4, 1))
    kernel = functools.partial(_linear_kernel, activation=activation)
    return pl.pallas_call(
        kernel,
        out_shape=jax.ShapeDtypeStruct((M, N), out_dtype),
        grid=grid,
        in_specs=[
            pl.BlockSpec((tm, tk), lambda i, j, k: (i, k)),
            pl.BlockSpec((tk, tn), lambda i, j, k: (k, j)),
            pl.BlockSpec((1, tn), lambda i, j, k: (0, j)),
        ],
        out_specs=pl.BlockSpec((tm, tn), lambda i, j, k: (i, j)),
        scratch_shapes=[pltpu.VMEM((tm, tn), jnp.float32)],
        compiler_params=pltpu.CompilerParams(
            dimension_semantics=("parallel", "parallel", "arbitrary"),
            vmem_limit_bytes=vmem),
    )(x.astype(jnp.bfloat16), w.astype(jnp.bfloat16), b.astype(jnp.float32))


# ----------------------------------------------------------------------------
# Linear with fused residual-add + LayerNorm epilogue (tn = N = full hidden dim)
# ----------------------------------------------------------------------------
def _linear_res_ln_kernel(x_ref, w_ref, b_ref, r_ref, g_ref, be_ref, o_ref,
                          acc_ref, *, eps):
    @pl.when(pl.program_id(1) == 0)
    def _():
        acc_ref[...] = jnp.zeros_like(acc_ref)

    acc_ref[...] += jnp.dot(x_ref[...], w_ref[...],
                            preferred_element_type=jnp.float32)

    @pl.when(pl.program_id(1) == pl.num_programs(1) - 1)
    def _():
        y = acc_ref[...] + b_ref[...] + r_ref[...].astype(jnp.float32)
        mean = jnp.mean(y, axis=-1, keepdims=True)
        var = jnp.mean((y - mean) ** 2, axis=-1, keepdims=True)   # biased variance
        yn = (y - mean) * jax.lax.rsqrt(var + eps)
        o_ref[...] = (yn * g_ref[...] + be_ref[...]).astype(o_ref.dtype)


def linear_res_ln(x, w, b, residual, gamma, beta, eps, out_dtype=jnp.bfloat16):
    """LayerNorm((x @ w + b) + residual) fused; dropout = identity (eval)."""
    M, K = x.shape
    N = w.shape[1]
    tm = _choose_tile(M, 512, 16)
    tk = _choose_tile(K, 512, 128)
    grid = (M // tm, K // tk)
    vmem = _vmem_limit(((tm, tk), 2, 2), ((tk, N), 2, 2), ((1, N), 4, 6),
                       ((tm, N), 2, 2), ((tm, N), 2, 2), ((tm, N), 4, 1))
    kernel = functools.partial(_linear_res_ln_kernel, eps=eps)
    return pl.pallas_call(
        kernel,
        out_shape=jax.ShapeDtypeStruct((M, N), out_dtype),
        grid=grid,
        in_specs=[
            pl.BlockSpec((tm, tk), lambda i, k: (i, k)),
            pl.BlockSpec((tk, N), lambda i, k: (k, 0)),
            pl.BlockSpec((1, N), lambda i, k: (0, 0)),
            pl.BlockSpec((tm, N), lambda i, k: (i, 0)),   # residual (read once per i)
            pl.BlockSpec((1, N), lambda i, k: (0, 0)),    # gamma
            pl.BlockSpec((1, N), lambda i, k: (0, 0)),    # beta
        ],
        out_specs=pl.BlockSpec((tm, N), lambda i, k: (i, 0)),
        scratch_shapes=[pltpu.VMEM((tm, N), jnp.float32)],
        compiler_params=pltpu.CompilerParams(
            dimension_semantics=("parallel", "arbitrary"),
            vmem_limit_bytes=vmem),
    )(x.astype(jnp.bfloat16), w.astype(jnp.bfloat16), b.astype(jnp.float32),
      residual.astype(jnp.bfloat16), gamma.astype(jnp.float32),
      beta.astype(jnp.float32))


# ----------------------------------------------------------------------------
# Standalone LayerNorm (only used for the embeddings)
# ----------------------------------------------------------------------------
def _ln_kernel(x_ref, g_ref, b_ref, o_ref, *, eps):
    x = x_ref[...].astype(jnp.float32)
    mean = jnp.mean(x, axis=-1, keepdims=True)
    var = jnp.mean((x - mean) ** 2, axis=-1, keepdims=True)
    y = (x - mean) * jax.lax.rsqrt(var + eps)
    o_ref[...] = (y * g_ref[...] + b_ref[...]).astype(o_ref.dtype)


def layernorm(x, gamma, beta, eps=1e-12, out_dtype=jnp.bfloat16):
    M, H = x.shape
    tm = _choose_tile(M, 1024, 16)
    grid = (M // tm,)
    vmem = _vmem_limit(((tm, H), 2, 2), ((1, H), 4, 4), ((tm, H), 2, 2))
    row_spec = pl.BlockSpec((tm, H), lambda i: (i, 0))
    vec_spec = pl.BlockSpec((1, H), lambda i: (0, 0))
    return pl.pallas_call(
        functools.partial(_ln_kernel, eps=eps),
        out_shape=jax.ShapeDtypeStruct((M, H), out_dtype),
        grid=grid,
        in_specs=[row_spec, vec_spec, vec_spec],
        out_specs=row_spec,
        compiler_params=pltpu.CompilerParams(
            dimension_semantics=("parallel",), vmem_limit_bytes=vmem),
    )(x, gamma.astype(jnp.float32), beta.astype(jnp.float32))


# ----------------------------------------------------------------------------
# Attention core: reads Q/K/V straight from the (B*S, 3H) QKV activation via
# column-offset BlockSpecs, writes (B*S, H) lane-dense.  No XLA transposes.
# ----------------------------------------------------------------------------
def _attention_kernel(q_ref, k_ref, v_ref, m_ref, o_ref, *, heads, head_dim, scale):
    mask = m_ref[0]                                          # (1, S) additive, f32
    outs = []
    for h in range(heads):                                   # small static unroll
        lo, hi = h * head_dim, (h + 1) * head_dim
        q = q_ref[:, lo:hi]                                  # (S, Dh) bf16
        k = k_ref[:, lo:hi]
        v = v_ref[:, lo:hi]
        # q @ k.T via dot_general (no in-kernel transpose).
        s = jax.lax.dot_general(q, k, (((1,), (1,)), ((), ())),
                                preferred_element_type=jnp.float32)   # (S, S)
        s = s * scale + mask
        s = s - jnp.max(s, axis=-1, keepdims=True)
        p = jnp.exp(s)
        p = p * pl.reciprocal(jnp.sum(p, axis=-1, keepdims=True), approx=True)
        outs.append(jnp.dot(p.astype(v.dtype), v,
                            preferred_element_type=jnp.float32))      # (S, Dh)
    # Single lane-dense store of all heads in this block (hb*Dh >= 128 lanes).
    o_ref[...] = jnp.concatenate(outs, axis=-1).astype(o_ref.dtype)


def attention_core(qkv, add_mask, B, S, num_heads, head_dim,
                   out_dtype=jnp.bfloat16):
    """qkv: (B*S, 3H) bf16 with columns [Q | K | V], heads contiguous inside each.
    add_mask: (B, 1, S) additive (-10000 at pads).  Returns (B*S, H)."""
    H = num_heads * head_dim
    # Cap heads per block at 4: bounds the per-block working set on v7x (64 MiB
    # VMEM) while keeping blocks lane-dense (hb*Dh >= 128 for Dh >= 32).
    hb = 1
    for d in range(1, num_heads + 1):
        if num_heads % d == 0 and d <= 4:
            hb = d
    nhb = num_heads // hb              # head-group count = column blocks of H
    blk = hb * head_dim
    scale = 1.0 / (head_dim ** 0.5)
    vmem = _vmem_limit(((S, blk), 2, 6), ((1, 1, S), 4, 2), ((S, blk), 2, 2),
                       ((S, S), 4, 2))
    kernel = functools.partial(_attention_kernel, heads=hb,
                               head_dim=head_dim, scale=scale)
    # TODO(synk): for very long sequences (S >= 2k) add a flash-style S_q grid
    # axis instead of materializing full (S, S) scores per head.
    return pl.pallas_call(
        kernel,
        out_shape=jax.ShapeDtypeStruct((B * S, H), out_dtype),
        grid=(B, nhb),
        in_specs=[
            pl.BlockSpec((S, blk), lambda b, g: (b, g)),             # Q columns
            pl.BlockSpec((S, blk), lambda b, g: (b, nhb + g)),       # K columns
            pl.BlockSpec((S, blk), lambda b, g: (b, 2 * nhb + g)),   # V columns
            pl.BlockSpec((1, 1, S), lambda b, g: (b, 0, 0)),         # mask
        ],
        out_specs=pl.BlockSpec((S, blk), lambda b, g: (b, g)),
        compiler_params=pltpu.CompilerParams(
            dimension_semantics=("parallel", "parallel"),
            vmem_limit_bytes=vmem),
    )(qkv, qkv, qkv, add_mask.astype(jnp.float32))


# ----------------------------------------------------------------------------
# Model (parameter init + forward glue)
# ----------------------------------------------------------------------------
def init_params(key, cfg, num_labels1, num_labels2):
    H = cfg["hidden_size"]
    I = cfg["intermediate_size"]
    std = cfg["initializer_range"]
    keys = iter(jax.random.split(key, 8 + 6 * cfg["num_hidden_layers"]))

    def nrm(shape, dtype=jnp.bfloat16):
        return (jax.random.normal(next(keys), shape, jnp.float32) * std).astype(dtype)

    def zeros(shape):
        return jnp.zeros(shape, jnp.float32)

    params = {
        "word_emb": nrm((cfg["vocab_size"], H), jnp.float32),
        "pos_emb": nrm((cfg["max_position_embeddings"], H), jnp.float32),
        "tok_emb": nrm((cfg["type_vocab_size"], H), jnp.float32),
        "emb_ln_g": jnp.ones((1, H), jnp.float32),
        "emb_ln_b": zeros((1, H)),
        "layers": [],
        # Pooler + classifier heads are tiny -> plain XLA dots, kept in f32.
        "pooler_w": nrm((H, H), jnp.float32),
        "pooler_b": jnp.zeros((H,), jnp.float32),
        "cls1_w": nrm((H, num_labels1), jnp.float32),
        "cls1_b": jnp.zeros((num_labels1,), jnp.float32),
        "cls2_w": nrm((H, num_labels2), jnp.float32),
        "cls2_b": jnp.zeros((num_labels2,), jnp.float32),
    }
    for _ in range(cfg["num_hidden_layers"]):
        params["layers"].append({
            # Fused QKV projection: (H, 3H), columns [Q | K | V].
            "qkv_w": nrm((H, 3 * H)), "qkv_b": zeros((1, 3 * H)),
            "o_w": nrm((H, H)), "o_b": zeros((1, H)),
            "ln1_g": jnp.ones((1, H), jnp.float32), "ln1_b": zeros((1, H)),
            "i_w": nrm((H, I)), "i_b": zeros((1, I)),
            "f_w": nrm((I, H)), "f_b": zeros((1, H)),
            "ln2_g": jnp.ones((1, H), jnp.float32), "ln2_b": zeros((1, H)),
        })
    return params


def encoder_layer(x, p, add_mask, B, S, nH, Dh, eps):
    # Fused Q/K/V projection; heads are split purely via BlockSpec index maps
    # inside attention_core (no XLA reshape/transpose round-trips).
    qkv = linear(x, p["qkv_w"], p["qkv_b"])                 # (B*S, 3H) bf16
    ctx = attention_core(qkv, add_mask, B, S, nH, Dh)       # (B*S, H) bf16
    # Attention output projection with fused residual-add + LayerNorm epilogue.
    x = linear_res_ln(ctx, p["o_w"], p["o_b"], x, p["ln1_g"], p["ln1_b"], eps)
    inter = linear(x, p["i_w"], p["i_b"], activation="gelu")          # (B*S, I)
    x = linear_res_ln(inter, p["f_w"], p["f_b"], x, p["ln2_g"], p["ln2_b"], eps)
    return x


def bert_two_seq_classification_forward(params, input_ids, cfg,
                                         token_type_ids=None, attention_mask=None):
    B, S = input_ids.shape
    H = cfg["hidden_size"]
    nH = cfg["num_attention_heads"]
    Dh = H // nH
    eps = cfg["layer_norm_eps"]

    if attention_mask is None:
        attention_mask = (input_ids > 0).astype(jnp.float32)      # pad_token_id == 0
    if token_type_ids is None:
        token_type_ids = jnp.zeros_like(input_ids)
    pos_ids = jnp.arange(S)

    # Embeddings (gather is glue); sum cast to bf16 before the mem-bound LN.
    emb = (params["word_emb"][input_ids]
           + params["pos_emb"][pos_ids][None, :, :]
           + params["tok_emb"][token_type_ids])
    x = emb.reshape(B * S, H).astype(jnp.bfloat16)
    x = layernorm(x, params["emb_ln_g"], params["emb_ln_b"], eps)

    add_mask = ((1.0 - attention_mask) * -10000.0).reshape(B, 1, S)

    for p in params["layers"]:
        x = encoder_layer(x, p, add_mask, B, S, nH, Dh, eps)

    seq_out = x.reshape(B, S, H)
    first_tok = seq_out[:, 0, :].astype(jnp.float32)               # (B, H)
    # Pooler (last_fn='tanh') + two classifier heads: tiny GEMMs, plain XLA.
    pooled = jnp.tanh(first_tok @ params["pooler_w"] + params["pooler_b"])
    # self.dropout(pooled_output) -> identity in eval mode.
    logits1 = pooled @ params["cls1_w"] + params["cls1_b"]
    logits2 = pooled @ params["cls2_w"] + params["cls2_b"]
    # TODO(synk): labels1/labels2 CrossEntropyLoss branch not exercised (inference path).
    return logits1, logits2


# ----------------------------------------------------------------------------
if __name__ == "__main__":
    cfg = dict(
        vocab_size=100,
        hidden_size=128,
        num_hidden_layers=2,
        num_attention_heads=4,
        intermediate_size=256,
        max_position_embeddings=64,
        type_vocab_size=2,
        layer_norm_eps=1e-12,
        initializer_range=0.02,
    )
    num_labels1, num_labels2 = 3, 5
    B, S = 2, 16

    key = jax.random.PRNGKey(0)
    pkey, dkey = jax.random.split(key)
    params = init_params(pkey, cfg, num_labels1, num_labels2)

    input_ids = jax.random.randint(dkey, (B, S), 1, cfg["vocab_size"], dtype=jnp.int32)
    input_ids = input_ids.at[1, -3:].set(0)   # pad tokens -> exercises the additive mask

    logits1, logits2 = bert_two_seq_classification_forward(params, input_ids, cfg)
    jax.block_until_ready((logits1, logits2))

    assert logits1.shape == (B, num_labels1)
    assert logits2.shape == (B, num_labels2)
    assert jnp.all(jnp.isfinite(logits1)) and jnp.all(jnp.isfinite(logits2))
    print("KERNEL_OK")
</pallas_src>

<mosaic_0001>
module attributes {stable_mosaic.version = 11 : i64} {
  func.func @_ln_kernel(%arg0: i32, %arg1: memref<32x128xbf16, #tpu.memory_space<vmem>>, %arg2: memref<1x128xf32, #tpu.memory_space<vmem>>, %arg3: memref<1x128xf32, #tpu.memory_space<vmem>>, %arg4: memref<32x128xbf16, #tpu.memory_space<vmem>>) attributes {dimension_semantics = [#tpu.dimension_semantics<parallel>], iteration_bounds = array<i64: 1>, scalar_prefetch = 0 : i64, scratch_operands = 0 : i64, tpu.core_type = #tpu.core_type<tc>, window_params = [{transform_indices = @transform_0, window_bounds = array<i64: 32, 128>}, {pipeline_mode = #tpu.pipeline_mode<synchronous>, transform_indices = @transform_1, window_bounds = array<i64: 1, 128>}, {pipeline_mode = #tpu.pipeline_mode<synchronous>, transform_indices = @transform_2, window_bounds = array<i64: 1, 128>}, {transform_indices = @transform_3, window_bounds = array<i64: 32, 128>}]} {
    %c0 = arith.constant 0 : index
    %c0_0 = arith.constant 0 : index
    %0 = vector.load %arg1[%c0, %c0_0] : memref<32x128xbf16, #tpu.memory_space<vmem>>, vector<32x128xbf16>
    %1 = arith.extf %0 : vector<32x128xbf16> to vector<32x128xf32>
    %cst = arith.constant dense<0.000000e+00> : vector<32xf32>
    %2 = vector.multi_reduction <add>, %1, %cst [1] : vector<32x128xf32> to vector<32xf32>
    %3 = vector.shape_cast %2 : vector<32xf32> to vector<32x1xf32>
    %cst_1 = arith.constant 1.280000e+02 : f32
    %4 = vector.broadcast %cst_1 : f32 to vector<32x1xf32>
    %5 = arith.divf %3, %4 : vector<32x1xf32>
    %6 = vector.broadcast %5 : vector<32x1xf32> to vector<32x128xf32>
    %7 = arith.subf %1, %6 : vector<32x128xf32>
    %8 = arith.mulf %7, %7 : vector<32x128xf32>
    %cst_2 = arith.constant dense<0.000000e+00> : vector<32xf32>
    %9 = vector.multi_reduction <add>, %8, %cst_2 [1] : vector<32x128xf32> to vector<32xf32>
    %10 = vector.shape_cast %9 : vector<32xf32> to vector<32x1xf32>
    %cst_3 = arith.constant 1.280000e+02 : f32
    %11 = vector.broadcast %cst_3 : f32 to vector<32x1xf32>
    %12 = arith.divf %10, %11 : vector<32x1xf32>
    %13 = vector.broadcast %5 : vector<32x1xf32> to vector<32x128xf32>
    %14 = arith.subf %1, %13 : vector<32x128xf32>
    %cst_4 = arith.constant 9.99999996E-13 : f32
    %15 = vector.broadcast %cst_4 : f32 to vector<32x1xf32>
    %16 = arith.addf %12, %15 : vector<32x1xf32>
    %17 = math.rsqrt %16 : vector<32x1xf32>
    %18 = vector.broadcast %17 : vector<32x1xf32> to vector<32x128xf32>
    %19 = arith.mulf %14, %18 : vector<32x128xf32>
    %c0_5 = arith.constant 0 : index
    %c0_6 = arith.constant 0 : index
    %20 = vector.load %arg2[%c0_5, %c0_6] : memref<1x128xf32, #tpu.memory_space<vmem>>, vector<1x128xf32>
    %21 = vector.broadcast %20 : vector<1x128xf32> to vector<32x128xf32>
    %22 = arith.mulf %19, %21 : vector<32x128xf32>
    %c0_7 = arith.constant 0 : index
    %c0_8 = arith.constant 0 : index
    %23 = vector.load %arg3[%c0_7, %c0_8] : memref<1x128xf32, #tpu.memory_space<vmem>>, vector<1x128xf32>
    %24 = vector.broadcast %23 : vector<1x128xf32> to vector<32x128xf32>
    %25 = arith.addf %22, %24 : vector<32x128xf32>
    %26 = arith.truncf %25 : vector<32x128xf32> to vector<32x128xbf16>
    %c0_9 = arith.constant 0 : index
    %c0_10 = arith.constant 0 : index
    %27 = vector.load %arg4[%c0_9, %c0_10] : memref<32x128xbf16, #tpu.memory_space<vmem>>, vector<32x128xbf16>
    tpu.vector_store %arg4[%c0_9, %c0_10], %26 {strides = array<i32>} : memref<32x128xbf16, #tpu.memory_space<vmem>>, vector<32x128xbf16>,
    return
  }
  func.func @transform_0(%arg0: i32) -> (i32, i32) {
    %c0_i32 = arith.constant 0 : i32
    %c0_i32_0 = arith.constant 0 : i32
    return %arg0, %c0_i32 : i32, i32
  }
  func.func @transform_1(%arg0: i32) -> (i32, i32) {
    %c0_i32 = arith.constant 0 : i32
    %c0_i32_0 = arith.constant 0 : i32
    %c0_i32_1 = arith.constant 0 : i32
    return %c0_i32, %c0_i32_0 : i32, i32
  }
  func.func @transform_2(%arg0: i32) -> (i32, i32) {
    %c0_i32 = arith.constant 0 : i32
    %c0_i32_0 = arith.constant 0 : i32
    %c0_i32_1 = arith.constant 0 : i32
    return %c0_i32, %c0_i32_0 : i32, i32
  }
  func.func @transform_3(%arg0: i32) -> (i32, i32) {
    %c0_i32 = arith.constant 0 : i32
    %c0_i32_0 = arith.constant 0 : i32
    return %arg0, %c0_i32 : i32, i32
  }
}

</mosaic_0001>

<llo_original>
// kernel: tpu_custom_call.1
$region0: #{tpu_custom_call.1}
  #allocation0 [shape = 'u32[]', space=smem, size = 0x4, offset = 0x4, fixed_abs, tag = 'smem constant byte address 0x4 - core index']
  #allocation1 [shape = 'u32[144,128]{1,0:T(1,128)}', space=vmem, size = 0x12000, scoped, tag = 'internal scratch']
  %s0 = inlined_call_operand.hbm [shape: bf16[32,128], index: 0, kind: input, shape index: {}]
  %s1 = inlined_call_operand.vmem [shape: f32[1,128], index: 1, kind: input, shape index: {}]
  %s2 = inlined_call_operand.vmem [shape: f32[1,128], index: 2, kind: input, shape index: {}]
  %s3 = inlined_call_operand.hbm [shape: bf16[32,128], index: 3, kind: output, shape index: {}]
  %s4 = sld [smem:[#allocation0]]
  $region26: #{tpu_custom_call.1} parent=0
    _
  %s6 = ssub.s32 1, %s4
  %s7 = scalar_select 0, %s6, %s4
  $region1: #{tpu_custom_call.1} parent=0
    #allocation2 [shape = 'u8[8192]{0}', space=vmem, size = 0x2000, scoped, tag = 'input window, operand 0, single buffered']
    #allocation3 [shape = 's32[1]{0}', space=sflag, size = 0x4, scoped, tag = 'scoped memory for tpu_custom_call.1']
    #allocation4 [shape = 's32[1]{0}', space=sflag, size = 0x4, scoped, tag = 'scoped memory for tpu_custom_call.1']
    #allocation5 [shape = 'u8[8192]{0}', space=vmem, size = 0x2000, scoped, tag = 'output window, operand 0, single buffered']
    %8 = vsyncpa [#allocation3], 0
    %9 = vsyncpa [#allocation4], 0
    // Predicated region
    $region2: #{tpu_custom_call.1} parent=1 // pred_check
      _
    $region3: #{tpu_custom_call.1} parent=1 // pred_check_branch
      %11 = sbr.rel (0) target = $region5
    $region4: #{tpu_custom_call.1} parent=1 // pred_region
      %s13 = ssub.s32 256, 256
      %14 = vsyncadd [#allocation3], %s13
      %s15 = sshll.u32 [#allocation2], 4
      %s16 = int_to_ptr.vmem [resolvable:$true] %s15
      %21 = dma.hbm_to_vmem [thread:$0]  %s0, 256, %s16, [#allocation3], 64, 64, 4
    $region5: #{tpu_custom_call.1} parent=1 // pred_fallthru
      _
    // Predicated region
    $region6: #{tpu_custom_call.1} parent=1 // pred_check
      _
    $region7: #{tpu_custom_call.1} parent=1 // pred_check_branch
      %23 = sbr.rel (0) target = $region9
    $region8: #{tpu_custom_call.1} parent=1 // pred_region
      _
    $region9: #{tpu_custom_call.1} parent=1 // pred_fallthru
      _
    // Predicated region
    $region10: #{tpu_custom_call.1} parent=1 // pred_check
      _
    $region11: #{tpu_custom_call.1} parent=1 // pred_check_branch
      %25 = sbr.rel (0) target = $region13
    $region12: #{tpu_custom_call.1} parent=1 // pred_region
      _
    $region13: #{tpu_custom_call.1} parent=1 // pred_fallthru
      _
    // Predicated region
    $region14: #{tpu_custom_call.1} parent=1 // pred_check
      _
    $region15: #{tpu_custom_call.1} parent=1 // pred_check_branch
      %27 = sbr.rel (0) target = $region17
    $region16: #{tpu_custom_call.1} parent=1 // pred_region
      %28 = dma.done [#allocation3], 256
    $region17: #{tpu_custom_call.1} parent=1 // pred_fallthru
      _
    %v29 = vld [vmem:[#allocation2] sm:$0xf]
    %v30 = vld [vmem:[#allocation2 + $0x4] sm:$0xf]
    %v31 = vld [vmem:[#allocation2 + $0x8] sm:$0xf]
    %v32 = vld [vmem:[#allocation2 + $0xc] sm:$0xf]
    %v33 = vunpack.c.l.bf16 %v29
    %v34 = vunpack.c.l.bf16 %v30
    %v35 = vunpack.c.l.bf16 %v31
    %v36 = vunpack.c.l.bf16 %v32
    %37 = vadd.xlane.f32.xlu0 %v33
    %v38 = vpop.xlane.xlu0 %37
    %39 = vadd.xlane.f32.xlu0 %v34
    %v40 = vpop.xlane.xlu0 %39
    %41 = vadd.xlane.f32.xlu0 %v35
    %v42 = vpop.xlane.xlu0 %41
    %43 = vadd.xlane.f32.xlu0 %v36
    %v44 = vpop.xlane.xlu0 %43
    %v45 = vrcp.pop 128.0
    %v46 = vmul.f32 %v38, %v45
    %v47 = vmul.f32 %v40, %v45
    %v48 = vmul.f32 %v42, %v45
    %v49 = vmul.f32 %v44, %v45
    %v50 = vsub.f32 %v33, %v46
    %v51 = vsub.f32 %v34, %v47
    %v52 = vsub.f32 %v35, %v48
    %v53 = vsub.f32 %v36, %v49
    %v54 = vmul.f32 %v50, %v50
    %v55 = vmul.f32 %v51, %v51
    %v56 = vmul.f32 %v52, %v52
    %v57 = vmul.f32 %v53, %v53
    %58 = vadd.xlane.f32.xlu0 %v54
    %v59 = vpop.xlane.xlu0 %58
    %60 = vadd.xlane.f32.xlu0 %v55
    %v61 = vpop.xlane.xlu0 %60
    %62 = vadd.xlane.f32.xlu0 %v56
    %v63 = vpop.xlane.xlu0 %62
    %64 = vadd.xlane.f32.xlu0 %v57
    %v65 = vpop.xlane.xlu0 %64
    %v66 = vmul.f32 %v59, %v45
    %v67 = vmul.f32 %v61, %v45
    %v68 = vmul.f32 %v63, %v45
    %v69 = vmul.f32 %v65, %v45
    %v70 = vadd.f32 %v66, 1e-12
    %v71 = vadd.f32 %v67, 1e-12
    %v72 = vadd.f32 %v68, 1e-12
    %v73 = vadd.f32 %v69, 1e-12
    %v74 = vrsqrt.pop %v70
    %v75 = vrsqrt.pop %v71
    %v76 = vrsqrt.pop %v72
    %v77 = vrsqrt.pop %v73
    %v78 = vmul.f32 %v50, %v74
    %v79 = vmul.f32 %v51, %v75
    %v80 = vmul.f32 %v52, %v76
    %v81 = vmul.f32 %v53, %v77
    %v82 = vld [vmem:[%s1] sm:$0x1]
    %v84 = vlaneseq
    %v85 = vshrl.u32 %v84, 7
    %v86 = vsub.s32 0, %v85
    %v87 = vrot.slane %v82, %v86
    %v89 = vmul.f32 %v78, %v87
    %v90 = vmul.f32 %v79, %v87
    %v91 = vmul.f32 %v80, %v87
    %v92 = vmul.f32 %v81, %v87
    %v93 = vld [vmem:[%s2] sm:$0x1]
    %v95 = vlaneseq
    %v96 = vshrl.u32 %v95, 7
    %v97 = vsub.s32 0, %v96
    %v98 = vrot.slane %v93, %v97
    %v100 = vadd.f32 %v89, %v98
    %v101 = vadd.f32 %v90, %v98
    %v102 = vadd.f32 %v91, %v98
    %v103 = vadd.f32 %v92, %v98
    %v104 = vpack.c.bf16 %v101, %v100
    %v105 = vpack.c.bf16 %v103, %v102
    %v108 = vunpack.c.l.b16 %v104
    %v109 = vunpack.c.h.b16 %v104
    %v110 = vunpack.c.l.b16 %v105
    %v111 = vunpack.c.h.b16 %v105
    %v112 = vpack.c.b16 %v108, %v108
    %v113 = vpack.c.b16 %v109, %v109
    %v114 = vpack.c.b16 %v110, %v110
    %v115 = vpack.c.b16 %v111, %v111
    %120 = vst [vmem:[#allocation5] sm:$0xf] %v112
    %121 = vst [vmem:[#allocation5 + $0x4] sm:$0xf] %v113
    %122 = vst [vmem:[#allocation5 + $0x8] sm:$0xf] %v114
    %123 = vst [vmem:[#allocation5 + $0xc] sm:$0xf] %v115
    // Predicated region
    $region18: #{tpu_custom_call.1} parent=1 // pred_check
      _
    $region19: #{tpu_custom_call.1} parent=1 // pred_check_branch
      %125 = sbr.rel (0) target = $region21
    $region20: #{tpu_custom_call.1} parent=1 // pred_region
      %s127 = ssub.s32 256, 256
      %128 = vsyncadd [#allocation4], %s127
      %s129 = sshll.u32 [#allocation5], 4
      %s130 = int_to_ptr.vmem [resolvable:$true] %s129
      %135 = dma.vmem_to_hbm [thread:$0]  %s130, 256, %s3, [#allocation4], 64, 64, 4
    $region21: #{tpu_custom_call.1} parent=1 // pred_fallthru
      _
    // Predicated region
    $region22: #{tpu_custom_call.1} parent=1 // pred_check
      _
    $region23: #{tpu_custom_call.1} parent=1 // pred_check_branch
      %137 = sbr.rel (0) target = $region25
    $region24: #{tpu_custom_call.1} parent=1 // pred_region
      %138 = dma.done [#allocation4], 256
    $region25: #{tpu_custom_call.1} parent=1 // pred_fallthru
      _
    %139 = vsyncpa [#allocation3], 1
    %140 = vsyncpa [#allocation4], 1

</llo_original>
